<compile_context>
chip_gen: v6e
topology: v6e:2x2x1
jax: 0.10.0
libtpu: 0.0.40
codegen_flags: <defaults>
</compile_context>

<pallas_src>
import jax
import jax.numpy as jnp
from jax.experimental import pallas as pl
from jax.experimental.pallas import tpu as pltpu

HIDDEN = 32                 # args.hidden_size (divisible by num_heads=8)
LANES = 128                 # TPU lane width
PACK = LANES // HIDDEN      # tokens packed per lane-dense row (= 4)
EPS = 1e-5                  # nn.LayerNorm default eps
SEQ = 8                     # small demo: number of tokens fed to the adapter
ROW_TILE = 2048             # max packed rows (4 tokens each) per grid step
_HI = jax.lax.Precision.HIGHEST


def _cdiv(a, b):
    return -(-a // b)


def _round_up(a, b):
    return _cdiv(a, b) * b


# ----------------------------------------------------------------------------- kernel
def code_adapter_kernel(x_ref, w_ref, b_ref, out_ref):
    """x_ref : (tile, 128)   -- 4 tokens of HIDDEN=32 packed per 128-lane row
    w_ref : (3*128, 128)  -- [W_pre blockdiag ; W2 blockdiag ; segment-avg matrix]
    b_ref : (4, 128) f32  -- [b_pre ; b2 ; gamma ; beta], each tiled x4 over lanes
    """
    x = x_ref[...]                                    # (tile, 128) lane dense
    b = b_ref[...]                                    # (4, 128) f32
    b_pre, b2 = b[0:1, :], b[1:2, :]
    gamma, beta = b[2:3, :], b[3:4, :]
    wdt = w_ref.dtype

    # fused (out_proj . v_proj . dense_1) matmul, then ReLU
    h = jnp.dot(x, w_ref[0:LANES, :], preferred_element_type=jnp.float32) + b_pre
    h = jnp.maximum(h, 0.0)
    # TODO(synk): Dropout(p=0.3) is identity in eval mode; train-mode stochastic
    #             dropout is intentionally omitted.
    f = jnp.dot(h.astype(wdt), w_ref[LANES:2 * LANES, :],
                preferred_element_type=jnp.float32) + b2

    # residual + per-token (per 32-lane segment) LayerNorm.  mean and E[r^2] are
    # computed with the block-averaging matmul (exact segment mean, divide by
    # the true HIDDEN=32).  var = E[r^2] - mean^2 so both avg matmuls depend only
    # on r and can be pushed back-to-back into the MXU.
    r = x.astype(jnp.float32) + f
    avg = w_ref[2 * LANES:3 * LANES, :]
    mean = jnp.dot(r.astype(wdt), avg, preferred_element_type=jnp.float32)
    msq = jnp.dot((r * r).astype(wdt), avg, preferred_element_type=jnp.float32)
    var = jnp.maximum(msq - mean * mean, 0.0)         # biased variance, like torch
    y = (r - mean) * jax.lax.rsqrt(var + EPS) * gamma + beta
    out_ref[...] = y.astype(out_ref.dtype)


# ----------------------------------------------------------------------------- packing
def _fuse(params):
    """Fold attention(V -> out_proj) + FFN.dense_1 into one (H,H) matmul."""
    wv, bv, wo, bo, w1, b1, w2, b2, gamma, beta = params
    w_pre = jnp.dot(jnp.dot(wv, wo, precision=_HI), w1, precision=_HI)       # (H,H)
    b_pre = jnp.dot(jnp.dot(bv, wo, precision=_HI) + bo, w1, precision=_HI) + b1
    return w_pre, b_pre, w2, b2, gamma, beta


def _pack(fused):
    """Pack all operands into one weight slab + one bias slab (lane dense)."""
    w_pre, b_pre, w2, b2, gamma, beta = fused
    eye = jnp.eye(PACK, dtype=jnp.float32)
    w1_blk = jnp.kron(eye, w_pre)                                   # (128,128) blkdiag
    w2_blk = jnp.kron(eye, w2)                                      # (128,128) blkdiag
    avg_blk = jnp.kron(eye, jnp.full((HIDDEN, HIDDEN), 1.0 / HIDDEN, jnp.float32))
    w_slab = jnp.concatenate([w1_blk, w2_blk, avg_blk], axis=0)     # (384, 128)
    b_slab = jnp.concatenate(
        [jnp.tile(b_pre, (1, PACK)), jnp.tile(b2, (1, PACK)),
         jnp.tile(gamma, (1, PACK)), jnp.tile(beta, (1, PACK))], axis=0)  # (4, 128)
    return w_slab, b_slab


def _fused_xla(x, fused):
    """Tiny-input bypass: the same fused eval-mode math in plain XLA."""
    w_pre, b_pre, w2, b2, gamma, beta = fused
    h = jnp.maximum(jnp.dot(x, w_pre, precision=_HI) + b_pre, 0.0)
    f = jnp.dot(h, w2, precision=_HI) + b2
    r = x + f
    mean = jnp.mean(r, axis=-1, keepdims=True)
    var = jnp.mean((r - mean) ** 2, axis=-1, keepdims=True)
    return (r - mean) * jax.lax.rsqrt(var + EPS) * gamma + beta


# ----------------------------------------------------------------------------- wrapper
def code_adapter(x, params, *, row_tile=ROW_TILE, io_dtype=jnp.float32,
                 min_rows_for_kernel=64):
    """x: (seq, HIDDEN) f32; params: the 10 adapter weight/bias arrays."""
    seq, hid = x.shape
    assert hid == HIDDEN
    fused = _fuse(params)

    rows = _cdiv(seq, PACK)
    if rows < min_rows_for_kernel:
        # kernel-invocation overhead dwarfs the ~kFLOP of work -> plain XLA
        return _fused_xla(x, fused).astype(x.dtype)

    w_slab, b_slab = _pack(fused)
    if io_dtype != jnp.float32:
        w_slab = w_slab.astype(io_dtype)          # bias slab stays f32 (tiny)

    # Balanced row tiles: never round a mid-size input up by ~a whole tile, and
    # keep an even step count for big inputs so the "parallel" grid axis gives
    # each v7x TensorCore real rows.
    sublane = 16 if io_dtype == jnp.bfloat16 else 8
    num_steps = max(1, _cdiv(rows, row_tile))
    if rows >= 256:                               # >= ~1024 tokens: worth splitting
        num_steps = max(num_steps, 2)
    if num_steps > 1 and num_steps % 2:
        num_steps += 1
    tile = _round_up(_cdiv(rows, num_steps), sublane)
    padded_rows = num_steps * tile
    pad_tokens = padded_rows * PACK - seq

    # Lane-dense packing: 4 tokens side-by-side per 128-lane row.
    xp = jnp.pad(x, ((0, pad_tokens), (0, 0))).reshape(padded_rows, LANES)
    xp = xp.astype(io_dtype)

    out = pl.pallas_call(
        code_adapter_kernel,
        out_shape=jax.ShapeDtypeStruct((padded_rows, LANES), io_dtype),
        grid=(num_steps,),
        in_specs=[
            pl.BlockSpec((tile, LANES), lambda i: (i, 0)),     # activation stream
            pl.BlockSpec(w_slab.shape, lambda i: (0, 0)),      # weight slab, resident
            pl.BlockSpec(b_slab.shape, lambda i: (0, 0)),      # bias slab, resident
        ],
        out_specs=pl.BlockSpec((tile, LANES), lambda i: (i, 0)),
        compiler_params=pltpu.CompilerParams(
            # row tiles are independent -> shard across both TensorCores on v7x
            dimension_semantics=("parallel",)),
    )(xp, w_slab, b_slab)
    return out.reshape(padded_rows * PACK, HIDDEN)[:seq].astype(x.dtype)


# ----------------------------------------------------------------------------- reference
def make_params(key, hidden):
    """Deterministic synthetic parameters (same shapes the nn modules would have)."""
    ks = jax.random.split(key, 10)
    scale = 0.1
    wv = scale * jax.random.normal(ks[0], (hidden, hidden), jnp.float32)  # (in, out)
    bv = scale * jax.random.normal(ks[1], (1, hidden), jnp.float32)
    wo = scale * jax.random.normal(ks[2], (hidden, hidden), jnp.float32)
    bo = scale * jax.random.normal(ks[3], (1, hidden), jnp.float32)
    w1 = scale * jax.random.normal(ks[4], (hidden, hidden), jnp.float32)
    b1 = scale * jax.random.normal(ks[5], (1, hidden), jnp.float32)
    w2 = scale * jax.random.normal(ks[6], (hidden, hidden), jnp.float32)
    b2 = scale * jax.random.normal(ks[7], (1, hidden), jnp.float32)
    gamma = jnp.ones((1, hidden), jnp.float32)
    beta = jnp.zeros((1, hidden), jnp.float32)
    return (wv, bv, wo, bo, w1, b1, w2, b2, gamma, beta)


def reference(x, params):
    """Pure-JAX reference of the PyTorch forward (eval mode, unfused)."""
    wv, bv, wo, bo, w1, b1, w2, b2, gamma, beta = params
    v = jnp.dot(x, wv, precision=_HI) + bv
    attn = jnp.dot(v, wo, precision=_HI) + bo             # softmax over L=1 is exactly 1
    h = jnp.maximum(jnp.dot(attn, w1, precision=_HI) + b1, 0.0)   # dropout = identity
    f = jnp.dot(h, w2, precision=_HI) + b2
    r = x + f
    mean = jnp.mean(r, axis=-1, keepdims=True)
    var = jnp.mean((r - mean) ** 2, axis=-1, keepdims=True)       # biased, like torch
    return (r - mean) * jax.lax.rsqrt(var + EPS) * gamma + beta


if __name__ == "__main__":
    key = jax.random.PRNGKey(0)
    kx, kp = jax.random.split(key)
    params = make_params(kp, HIDDEN)

    # 1) small shape implied by the module: SEQ=8 tokens of hidden_size=32,
    #    forced through the Pallas kernel (single unpadded-ish grid step).
    x = jax.random.normal(kx, (SEQ, HIDDEN), jnp.float32)
    ref = reference(x, params)
    out = jax.block_until_ready(code_adapter(x, params, min_rows_for_kernel=0))
    assert out.shape == (SEQ, HIDDEN)
    assert jnp.allclose(out, ref, atol=1e-4, rtol=1e-4), "mismatch (small, kernel)"

    # 2) same small input via the tiny-input XLA bypass (default path).
    out_bp = jax.block_until_ready(code_adapter(x, params))
    assert jnp.allclose(out_bp, ref, atol=1e-4, rtol=1e-4), "mismatch (small, bypass)"

    # 3) mid-size input: exercises the balanced 2-step 'parallel' grid + padding.
    x_big = jax.random.normal(kx, (2056, HIDDEN), jnp.float32)
    ref_big = reference(x_big, params)
    out_big = jax.block_until_ready(code_adapter(x_big, params))
    assert jnp.allclose(out_big, ref_big, atol=1e-4, rtol=1e-4), "mismatch (big, f32)"

    # 4) bf16 I/O mode (memory-roofline path); relaxed tolerance, not bit-parity.
    out_bf16 = jax.block_until_ready(
        code_adapter(x_big, params, io_dtype=jnp.bfloat16))
    assert jnp.allclose(out_bf16, ref_big, atol=1e-1, rtol=1e-1), "mismatch (big, bf16)"

    print("KERNEL_OK")
</pallas_src>

<mosaic_0001>
module attributes {stable_mosaic.version = 11 : i64} {
  func.func @code_adapter_kernel(%arg0: i32, %arg1: memref<8x128xf32, #tpu.memory_space<vmem>>, %arg2: memref<384x128xf32, #tpu.memory_space<vmem>>, %arg3: memref<4x128xf32, #tpu.memory_space<vmem>>, %arg4: memref<8x128xf32, #tpu.memory_space<vmem>>) attributes {dimension_semantics = [#tpu.dimension_semantics<parallel>], iteration_bounds = array<i64: 1>, scalar_prefetch = 0 : i64, scratch_operands = 0 : i64, tpu.core_type = #tpu.core_type<tc>, window_params = [{transform_indices = @transform_0, window_bounds = array<i64: 8, 128>}, {pipeline_mode = #tpu.pipeline_mode<synchronous>, transform_indices = @transform_1, window_bounds = array<i64: 384, 128>}, {pipeline_mode = #tpu.pipeline_mode<synchronous>, transform_indices = @transform_2, window_bounds = array<i64: 4, 128>}, {transform_indices = @transform_3, window_bounds = array<i64: 8, 128>}]} {
    %c0 = arith.constant 0 : index
    %c0_0 = arith.constant 0 : index
    %0 = vector.load %arg1[%c0, %c0_0] : memref<8x128xf32, #tpu.memory_space<vmem>>, vector<8x128xf32>
    %c0_1 = arith.constant 0 : index
    %c0_2 = arith.constant 0 : index
    %1 = vector.load %arg3[%c0_1, %c0_2] : memref<4x128xf32, #tpu.memory_space<vmem>>, vector<4x128xf32>
    %2 = vector.extract_strided_slice %1 {offsets = [0, 0], sizes = [1, 128], strides = [1, 1]} : vector<4x128xf32> to vector<1x128xf32>
    %3 = vector.extract_strided_slice %1 {offsets = [1, 0], sizes = [1, 128], strides = [1, 1]} : vector<4x128xf32> to vector<1x128xf32>
    %4 = vector.extract_strided_slice %1 {offsets = [2, 0], sizes = [1, 128], strides = [1, 1]} : vector<4x128xf32> to vector<1x128xf32>
    %5 = vector.extract_strided_slice %1 {offsets = [3, 0], sizes = [1, 128], strides = [1, 1]} : vector<4x128xf32> to vector<1x128xf32>
    %c0_3 = arith.constant 0 : index
    %c0_4 = arith.constant 0 : index
    %6 = vector.load %arg2[%c0_3, %c0_4] : memref<384x128xf32, #tpu.memory_space<vmem>>, vector<128x128xf32>
    %cst = arith.constant dense<0.000000e+00> : vector<8x128xf32>
    %7 = tpu.matmul %0, %6, %cst {dimension_numbers = #tpu.dot_dimension_numbers<[1], [0], [0], [1], [0, 0, 1, 1], [], []>} : vector<8x128xf32>, vector<128x128xf32>, vector<8x128xf32> -> vector<8x128xf32>
    %8 = vector.broadcast %2 : vector<1x128xf32> to vector<8x128xf32>
    %9 = arith.addf %7, %8 : vector<8x128xf32>
    %cst_5 = arith.constant 0.000000e+00 : f32
    %10 = vector.broadcast %cst_5 : f32 to vector<8x128xf32>
    %11 = arith.maximumf %9, %10 : vector<8x128xf32>
    %c128 = arith.constant 128 : index
    %c0_6 = arith.constant 0 : index
    %12 = vector.load %arg2[%c128, %c0_6] : memref<384x128xf32, #tpu.memory_space<vmem>>, vector<128x128xf32>
    %cst_7 = arith.constant dense<0.000000e+00> : vector<8x128xf32>
    %13 = tpu.matmul %11, %12, %cst_7 {dimension_numbers = #tpu.dot_dimension_numbers<[1], [0], [0], [1], [0, 0, 1, 1], [], []>} : vector<8x128xf32>, vector<128x128xf32>, vector<8x128xf32> -> vector<8x128xf32>
    %14 = vector.broadcast %3 : vector<1x128xf32> to vector<8x128xf32>
    %15 = arith.addf %13, %14 : vector<8x128xf32>
    %16 = arith.addf %0, %15 : vector<8x128xf32>
    %c256 = arith.constant 256 : index
    %c0_8 = arith.constant 0 : index
    %17 = vector.load %arg2[%c256, %c0_8] : memref<384x128xf32, #tpu.memory_space<vmem>>, vector<128x128xf32>
    %cst_9 = arith.constant dense<0.000000e+00> : vector<8x128xf32>
    %18 = tpu.matmul %16, %17, %cst_9 {dimension_numbers = #tpu.dot_dimension_numbers<[1], [0], [0], [1], [0, 0, 1, 1], [], []>} : vector<8x128xf32>, vector<128x128xf32>, vector<8x128xf32> -> vector<8x128xf32>
    %19 = arith.mulf %16, %16 : vector<8x128xf32>
    %cst_10 = arith.constant dense<0.000000e+00> : vector<8x128xf32>
    %20 = tpu.matmul %19, %17, %cst_10 {dimension_numbers = #tpu.dot_dimension_numbers<[1], [0], [0], [1], [0, 0, 1, 1], [], []>} : vector<8x128xf32>, vector<128x128xf32>, vector<8x128xf32> -> vector<8x128xf32>
    %21 = arith.mulf %18, %18 : vector<8x128xf32>
    %22 = arith.subf %20, %21 : vector<8x128xf32>
    %cst_11 = arith.constant 0.000000e+00 : f32
    %23 = vector.broadcast %cst_11 : f32 to vector<8x128xf32>
    %24 = arith.maximumf %22, %23 : vector<8x128xf32>
    %25 = arith.subf %16, %18 : vector<8x128xf32>
    %cst_12 = arith.constant 9.99999974E-6 : f32
    %26 = vector.broadcast %cst_12 : f32 to vector<8x128xf32>
    %27 = arith.addf %24, %26 : vector<8x128xf32>
    %28 = math.rsqrt %27 : vector<8x128xf32>
    %29 = arith.mulf %25, %28 : vector<8x128xf32>
    %30 = vector.broadcast %4 : vector<1x128xf32> to vector<8x128xf32>
    %31 = arith.mulf %29, %30 : vector<8x128xf32>
    %32 = vector.broadcast %5 : vector<1x128xf32> to vector<8x128xf32>
    %33 = arith.addf %31, %32 : vector<8x128xf32>
    %c0_13 = arith.constant 0 : index
    %c0_14 = arith.constant 0 : index
    %34 = vector.load %arg4[%c0_13, %c0_14] : memref<8x128xf32, #tpu.memory_space<vmem>>, vector<8x128xf32>
    tpu.vector_store %arg4[%c0_13, %c0_14], %33 {strides = array<i32>} : memref<8x128xf32, #tpu.memory_space<vmem>>, vector<8x128xf32>,
    return
  }
  func.func @transform_0(%arg0: i32) -> (i32, i32) {
    %c0_i32 = arith.constant 0 : i32
    %c0_i32_0 = arith.constant 0 : i32
    return %arg0, %c0_i32 : i32, i32
  }
  func.func @transform_1(%arg0: i32) -> (i32, i32) {
    %c0_i32 = arith.constant 0 : i32
    %c0_i32_0 = arith.constant 0 : i32
    %c0_i32_1 = arith.constant 0 : i32
    return %c0_i32, %c0_i32_0 : i32, i32
  }
  func.func @transform_2(%arg0: i32) -> (i32, i32) {
    %c0_i32 = arith.constant 0 : i32
    %c0_i32_0 = arith.constant 0 : i32
    %c0_i32_1 = arith.constant 0 : i32
    return %c0_i32, %c0_i32_0 : i32, i32
  }
  func.func @transform_3(%arg0: i32) -> (i32, i32) {
    %c0_i32 = arith.constant 0 : i32
    %c0_i32_0 = arith.constant 0 : i32
    return %arg0, %c0_i32 : i32, i32
  }
}

</mosaic_0001>

<llo_original>
// kernel: tpu_custom_call.1
$region0: #{tpu_custom_call.1}
  #allocation0 [shape = 'u32[]', space=smem, size = 0x4, offset = 0x4, fixed_abs, tag = 'smem constant byte address 0x4 - core index']
  #allocation1 [shape = 'u32[144,128]{1,0:T(1,128)}', space=vmem, size = 0x12000, scoped, tag = 'internal scratch']
  %s0 = inlined_call_operand.hbm [shape: f32[8,128], index: 0, kind: input, shape index: {}]
  %s1 = inlined_call_operand.hbm [shape: f32[384,128], index: 1, kind: input, shape index: {}]
  %s2 = inlined_call_operand.hbm [shape: f32[4,128], index: 2, kind: input, shape index: {}]
  %s3 = inlined_call_operand.hbm [shape: f32[8,128], index: 3, kind: output, shape index: {}]
  %s4 = sld [smem:[#allocation0]]
  $region34: #{tpu_custom_call.1} parent=0
    _
  %s6 = ssub.s32 1, %s4
  %s7 = scalar_select 0, %s6, %s4
  $region1: #{tpu_custom_call.1} parent=0
    #allocation2 [shape = 'u8[4096]{0}', space=vmem, size = 0x1000, scoped, tag = 'input window, operand 0, single buffered']
    #allocation3 [shape = 's32[1]{0}', space=sflag, size = 0x4, scoped, tag = 'scoped memory for tpu_custom_call.1']
    #allocation4 [shape = 's32[1]{0}', space=sflag, size = 0x4, scoped, tag = 'scoped memory for tpu_custom_call.1']
    #allocation5 [shape = 'u8[196608]{0}', space=vmem, size = 0x30000, scoped, tag = 'input window, operand 1, single buffered']
    #allocation6 [shape = 's32[1]{0}', space=sflag, size = 0x4, scoped, tag = 'scoped memory for tpu_custom_call.1']
    #allocation7 [shape = 'u8[2048]{0}', space=vmem, size = 0x800, scoped, tag = 'input window, operand 2, single buffered']
    #allocation8 [shape = 'u8[4096]{0}', space=vmem, size = 0x1000, scoped, tag = 'output window, operand 0, single buffered']
    %8 = vsyncpa [#allocation3], 0
    %9 = vsyncpa [#allocation6], 0
    %10 = vsyncpa [#allocation4], 0
    // Predicated region
    $region2: #{tpu_custom_call.1} parent=1 // pred_check
      _
    $region3: #{tpu_custom_call.1} parent=1 // pred_check_branch
      %12 = sbr.rel (0) target = $region5
    $region4: #{tpu_custom_call.1} parent=1 // pred_region
      %s14 = ssub.s32 128, 128
      %15 = vsyncadd [#allocation3], %s14
      %s17 = sshll.u32 [#allocation2], 4
      %s18 = int_to_ptr.vmem [resolvable:$true] %s17
      %20 = dma.hbm_to_vmem [thread:$0]  %s0, 128, %s18, [#allocation3]
    $region5: #{tpu_custom_call.1} parent=1 // pred_fallthru
      _
    // Predicated region
    $region6: #{tpu_custom_call.1} parent=1 // pred_check
      _
    $region7: #{tpu_custom_call.1} parent=1 // pred_check_branch
      %22 = sbr.rel (0) target = $region9
    $region8: #{tpu_custom_call.1} parent=1 // pred_region
      %s24 = ssub.s32 6144, 6144
      %25 = vsyncadd [#allocation6], %s24
      %s26 = sshll.u32 [#allocation5], 4
      %s27 = int_to_ptr.vmem [resolvable:$true] %s26
      %32 = dma.hbm_to_vmem [thread:$0]  %s1, 6144, %s27, [#allocation6], 128, 128, 8
    $region9: #{tpu_custom_call.1} parent=1 // pred_fallthru
      _
    // Predicated region
    $region10: #{tpu_custom_call.1} parent=1 // pred_check
      _
    $region11: #{tpu_custom_call.1} parent=1 // pred_check_branch
      %34 = sbr.rel (0) target = $region13
    $region12: #{tpu_custom_call.1} parent=1 // pred_region
      %s36 = ssub.s32 64, 64
      %37 = vsyncadd [#allocation6], %s36
      %s39 = sshll.u32 [#allocation7], 4
      %s40 = int_to_ptr.vmem [resolvable:$true] %s39
      %42 = dma.hbm_to_vmem [thread:$0]  %s2, 64, %s40, [#allocation6]
    $region13: #{tpu_custom_call.1} parent=1 // pred_fallthru
      _
    // Predicated region
    $region14: #{tpu_custom_call.1} parent=1 // pred_check
      _
    $region15: #{tpu_custom_call.1} parent=1 // pred_check_branch
      %44 = sbr.rel (0) target = $region17
    $region16: #{tpu_custom_call.1} parent=1 // pred_region
      %45 = dma.done [#allocation3], 128
    $region17: #{tpu_custom_call.1} parent=1 // pred_fallthru
      _
    // Predicated region
    $region18: #{tpu_custom_call.1} parent=1 // pred_check
      _
    $region19: #{tpu_custom_call.1} parent=1 // pred_check_branch
      %47 = sbr.rel (0) target = $region21
    $region20: #{tpu_custom_call.1} parent=1 // pred_region
      %48 = dma.done [#allocation6], 6144
    $region21: #{tpu_custom_call.1} parent=1 // pred_fallthru
      _
    // Predicated region
    $region22: #{tpu_custom_call.1} parent=1 // pred_check
      _
    $region23: #{tpu_custom_call.1} parent=1 // pred_check_branch
      %50 = sbr.rel (0) target = $region25
    $region24: #{tpu_custom_call.1} parent=1 // pred_region
      %51 = dma.done [#allocation6], 64
    $region25: #{tpu_custom_call.1} parent=1 // pred_fallthru
      _
    %v52 = vld [vmem:[#allocation2] sm:$0xff]
    %v53 = vld [vmem:[#allocation7] sm:$0xf]
    %v54 = vld [vmem:[#allocation5] sm:$0xff]
    %v55 = vld [vmem:[#allocation5 + $0x8] sm:$0xff]
    %v56 = vld [vmem:[#allocation5 + $0x10] sm:$0xff]
    %v57 = vld [vmem:[#allocation5 + $0x18] sm:$0xff]
    %v58 = vld [vmem:[#allocation5 + $0x20] sm:$0xff]
    %v59 = vld [vmem:[#allocation5 + $0x28] sm:$0xff]
    %v60 = vld [vmem:[#allocation5 + $0x30] sm:$0xff]
    %v61 = vld [vmem:[#allocation5 + $0x38] sm:$0xff]
    %v62 = vld [vmem:[#allocation5 + $0x40] sm:$0xff]
    %v63 = vld [vmem:[#allocation5 + $0x48] sm:$0xff]
    %v64 = vld [vmem:[#allocation5 + $0x50] sm:$0xff]
    %v65 = vld [vmem:[#allocation5 + $0x58] sm:$0xff]
    %v66 = vld [vmem:[#allocation5 + $0x60] sm:$0xff]
    %v67 = vld [vmem:[#allocation5 + $0x68] sm:$0xff]
    %v68 = vld [vmem:[#allocation5 + $0x70] sm:$0xff]
    %v69 = vld [vmem:[#allocation5 + $0x78] sm:$0xff]
    %v70 = vlaneseq
    %v71 = vshrl.u32 %v70, 7
    %v72 = vsub.s32 0, %v71
    %v73 = vrot.slane %v53, %v72
    %74 = vmatprep.subr.mxu0 0.0
    %75 = vmatpush1.msra.mxu0 %v69
    %76 = vmatprep.subr.mxu0 0.0
    %77 = vmatpush1.msra.mxu0 %v68
    %78 = vmatprep.subr.mxu0 0.0
    %79 = vmatpush1.msra.mxu0 %v67
    %80 = vmatprep.subr.mxu0 0.0
    %81 = vmatpush1.msra.mxu0 %v66
    %82 = vmatprep.subr.mxu0 0.0
    %83 = vmatpush1.msra.mxu0 %v65
    %84 = vmatprep.subr.mxu0 0.0
    %85 = vmatpush1.msra.mxu0 %v64
    %86 = vmatprep.subr.mxu0 0.0
    %87 = vmatpush1.msra.mxu0 %v63
    %88 = vmatprep.subr.mxu0 0.0
    %89 = vmatpush1.msra.mxu0 %v62
    %90 = vmatprep.subr.mxu0 0.0
    %91 = vmatpush1.msra.mxu0 %v61
    %92 = vmatprep.subr.mxu0 0.0
    %93 = vmatpush1.msra.mxu0 %v60
    %94 = vmatprep.subr.mxu0 0.0
    %95 = vmatpush1.msra.mxu0 %v59
    %96 = vmatprep.subr.mxu0 0.0
    %97 = vmatpush1.msra.mxu0 %v58
    %98 = vmatprep.subr.mxu0 0.0
    %99 = vmatpush1.msra.mxu0 %v57
    %100 = vmatprep.subr.mxu0 0.0
    %101 = vmatpush1.msra.mxu0 %v56
    %102 = vmatprep.subr.mxu0 0.0
    %103 = vmatpush1.msra.mxu0 %v55
    %104 = vmatprep.subr.mxu0 0.0
    %105 = vmatpush1.msra.mxu0 %v54
    %106 = vmatprep.subr.mxu0 0.0
    %107 = vmatpush2.msra.mxu0 0.0
    %108 = vmatprep.subr.mxu0 0.0
    %109 = vmatpush2.msra.mxu0 0.0
    %110 = vmatprep.subr.mxu0 0.0
    %111 = vmatpush2.msra.mxu0 0.0
    %112 = vmatprep.subr.mxu0 0.0
    %113 = vmatpush2.msra.mxu0 0.0
    %114 = vmatprep.subr.mxu0 0.0
    %115 = vmatpush2.msra.mxu0 0.0
    %116 = vmatprep.subr.mxu0 0.0
    %117 = vmatpush2.msra.mxu0 0.0
    %118 = vmatprep.subr.mxu0 0.0
    %119 = vmatpush2.msra.mxu0 0.0
    %120 = vmatprep.subr.mxu0 0.0
    %121 = vmatpush2.msra.mxu0 0.0
    %122 = vmatprep.subr.mxu0 0.0
    %123 = vmatpush2.msra.mxu0 0.0
    %124 = vmatprep.subr.mxu0 0.0
    %125 = vmatpush2.msra.mxu0 0.0
    %126 = vmatprep.subr.mxu0 0.0
    %127 = vmatpush2.msra.mxu0 0.0
    %128 = vmatprep.subr.mxu0 0.0
    %129 = vmatpush2.msra.mxu0 0.0
    %130 = vmatprep.subr.mxu0 0.0
    %131 = vmatpush2.msra.mxu0 0.0
    %132 = vmatprep.subr.mxu0 0.0
    %133 = vmatpush2.msra.mxu0 0.0
    %134 = vmatprep.subr.mxu0 0.0
    %135 = vmatpush2.msra.mxu0 0.0
    %136 = vmatprep.subr.mxu0 0.0
    %137 = vmatpush2.msra.mxu0 0.0
    %138 = vmatprep.mubr.f32.mxu0 0.0
    %139 = vmatmul.mubr.f32.gmra.mxu0 %v52
    %v140 = vpop.f32.mrf.mxu0
    %v141 = vadd.f32 %v73, %v140
    %v142 = vpop.f32.mrf.mxu0
    %143 = vdwg.mxu0
    %v144 = vmax.f32 %v141, 0.0
    %v145 = vld [vmem:[#allocation5 + $0x80] sm:$0xff]
    %v146 = vld [vmem:[#allocation5 + $0x88] sm:$0xff]
    %v147 = vld [vmem:[#allocation5 + $0x90] sm:$0xff]
    %v148 = vld [vmem:[#allocation5 + $0x98] sm:$0xff]
    %v149 = vld [vmem:[#allocation5 + $0xa0] sm:$0xff]
    %v150 = vld [vmem:[#allocation5 + $0xa8] sm:$0xff]
    %v151 = vld [vmem:[#allocation5 + $0xb0] sm:$0xff]
    %v152 = vld [vmem:[#allocation5 + $0xb8] sm:$0xff]
    %v153 = vld [vmem:[#allocation5 + $0xc0] sm:$0xff]
    %v154 = vld [vmem:[#allocation5 + $0xc8] sm:$0xff]
    %v155 = vld [vmem:[#allocation5 + $0xd0] sm:$0xff]
    %v156 = vld [vmem:[#allocation5 + $0xd8] sm:$0xff]
    %v157 = vld [vmem:[#allocation5 + $0xe0] sm:$0xff]
    %v158 = vld [vmem:[#allocation5 + $0xe8] sm:$0xff]
    %v159 = vld [vmem:[#allocation5 + $0xf0] sm:$0xff]
    %v160 = vld [vmem:[#allocation5 + $0xf8] sm:$0xff]
    %v161 = vlaneseq
    %v162 = vshrl.u32 %v161, 7
    %v163 = vsub.s32 1, %v162
    %v164 = vrot.slane %v53, %v163
    %165 = vmatprep.subr.mxu0 0.0
    %166 = vmatpush1.msra.mxu0 %v160
    %167 = vmatprep.subr.mxu0 0.0
    %168 = vmatpush1.msra.mxu0 %v159
    %169 = vmatprep.subr.mxu0 0.0
    %170 = vmatpush1.msra.mxu0 %v158
    %171 = vmatprep.subr.mxu0 0.0
    %172 = vmatpush1.msra.mxu0 %v157
    %173 = vmatprep.subr.mxu0 0.0
    %174 = vmatpush1.msra.mxu0 %v156
    %175 = vmatprep.subr.mxu0 0.0
    %176 = vmatpush1.msra.mxu0 %v155
    %177 = vmatprep.subr.mxu0 0.0
    %178 = vmatpush1.msra.mxu0 %v154
    %179 = vmatprep.subr.mxu0 0.0
    %180 = vmatpush1.msra.mxu0 %v153
    %181 = vmatprep.subr.mxu0 0.0
    %182 = vmatpush1.msra.mxu0 %v152
    %183 = vmatprep.subr.mxu0 0.0
    %184 = vmatpush1.msra.mxu0 %v151
    %185 = vmatprep.subr.mxu0 0.0
    %186 = vmatpush1.msra.mxu0 %v150
    %187 = vmatprep.subr.mxu0 0.0
    %188 = vmatpush1.msra.mxu0 %v149
    %189 = vmatprep.subr.mxu0 0.0
    %190 = vmatpush1.msra.mxu0 %v148
    %191 = vmatprep.subr.mxu0 0.0
    %192 = vmatpush1.msra.mxu0 %v147
    %193 = vmatprep.subr.mxu0 0.0
    %194 = vmatpush1.msra.mxu0 %v146
    %195 = vmatprep.subr.mxu0 0.0
    %196 = vmatpush1.msra.mxu0 %v145
    %197 = vmatprep.subr.mxu0 0.0
    %198 = vmatpush2.msra.mxu0 0.0
    %199 = vmatprep.subr.mxu0 0.0
    %200 = vmatpush2.msra.mxu0 0.0
    %201 = vmatprep.subr.mxu0 0.0
    %202 = vmatpush2.msra.mxu0 0.0
    %203 = vmatprep.subr.mxu0 0.0
    %204 = vmatpush2.msra.mxu0 0.0
    %205 = vmatprep.subr.mxu0 0.0
    %206 = vmatpush2.msra.mxu0 0.0
    %207 = vmatprep.subr.mxu0 0.0
    %208 = vmatpush2.msra.mxu0 0.0
    %209 = vmatprep.subr.mxu0 0.0
    %210 = vmatpush2.msra.mxu0 0.0
    %211 = vmatprep.subr.mxu0 0.0
    %212 = vmatpush2.msra.mxu0 0.0
    %213 = vmatprep.subr.mxu0 0.0
    %214 = vmatpush2.msra.mxu0 0.0
    %215 = vmatprep.subr.mxu0 0.0
    %216 = vmatpush2.msra.mxu0 0.0
    %217 = vmatprep.subr.mxu0 0.0
    %218 = vmatpush2.msra.mxu0 0.0
    %219 = vmatprep.subr.mxu0 0.0
    %220 = vmatpush2.msra.mxu0 0.0
    %221 = vmatprep.subr.mxu0 0.0
    %222 = vmatpush2.msra.mxu0 0.0
    %223 = vmatprep.subr.mxu0 0.0
    %224 = vmatpush2.msra.mxu0 0.0
    %225 = vmatprep.subr.mxu0 0.0
    %226 = vmatpush2.msra.mxu0 0.0
    %227 = vmatprep.subr.mxu0 0.0
    %228 = vmatpush2.msra.mxu0 0.0
    %229 = vmatprep.mubr.f32.mxu0 0.0
    %230 = vmatmul.mubr.f32.gmra.mxu0 %v144
    %v231 = vpop.f32.mrf.mxu0
    %v232 = vadd.f32 %v164, %v231
    %v233 = vpop.f32.mrf.mxu0
    %234 = vdwg.mxu0
    %v235 = vadd.f32 %v52, %v232
    %v236 = vld [vmem:[#allocation5 + $0x100] sm:$0xff]
    %v237 = vld [vmem:[#allocation5 + $0x108] sm:$0xff]
    %v238 = vld [vmem:[#allocation5 + $0x110] sm:$0xff]
    %v239 = vld [vmem:[#allocation5 + $0x118] sm:$0xff]
    %v240 = vld [vmem:[#allocation5 + $0x120] sm:$0xff]
    %v241 = vld [vmem:[#allocation5 + $0x128] sm:$0xff]
    %v242 = vld [vmem:[#allocation5 + $0x130] sm:$0xff]
    %v243 = vld [vmem:[#allocation5 + $0x138] sm:$0xff]
    %v244 = vld [vmem:[#allocation5 + $0x140] sm:$0xff]
    %v245 = vld [vmem:[#allocation5 + $0x148] sm:$0xff]
    %v246 = vld [vmem:[#allocation5 + $0x150] sm:$0xff]
    %v247 = vld [vmem:[#allocation5 + $0x158] sm:$0xff]
    %v248 = vld [vmem:[#allocation5 + $0x160] sm:$0xff]
    %v249 = vld [vmem:[#allocation5 + $0x168] sm:$0xff]
    %v250 = vld [vmem:[#allocation5 + $0x170] sm:$0xff]
    %v251 = vld [vmem:[#allocation5 + $0x178] sm:$0xff]
    %252 = vmatprep.subr.mxu0 0.0
    %253 = vmatpush1.msra.mxu0 %v251
    %254 = vmatprep.subr.mxu0 0.0
    %255 = vmatpush1.msra.mxu0 %v250
    %256 = vmatprep.subr.mxu0 0.0
    %257 = vmatpush1.msra.mxu0 %v249
    %258 = vmatprep.subr.mxu0 0.0
    %259 = vmatpush1.msra.mxu0 %v248
    %260 = vmatprep.subr.mxu0 0.0
    %261 = vmatpush1.msra.mxu0 %v247
    %262 = vmatprep.subr.mxu0 0.0
    %263 = vmatpush1.msra.mxu0 %v246
    %264 = vmatprep.subr.mxu0 0.0
    %265 = vmatpush1.msra.mxu0 %v245
    %266 = vmatprep.subr.mxu0 0.0
    %267 = vmatpush1.msra.mxu0 %v244
    %268 = vmatprep.subr.mxu0 0.0
    %269 = vmatpush1.msra.mxu0 %v243
    %270 = vmatprep.subr.mxu0 0.0
    %271 = vmatpush1.msra.mxu0 %v242
    %272 = vmatprep.subr.mxu0 0.0
    %273 = vmatpush1.msra.mxu0 %v241
    %274 = vmatprep.subr.mxu0 0.0
    %275 = vmatpush1.msra.mxu0 %v240
    %276 = vmatprep.subr.mxu0 0.0
    %277 = vmatpush1.msra.mxu0 %v239
    %278 = vmatprep.subr.mxu0 0.0
    %279 = vmatpush1.msra.mxu0 %v238
    %280 = vmatprep.subr.mxu0 0.0
    %281 = vmatpush1.msra.mxu0 %v237
    %282 = vmatprep.subr.mxu0 0.0
    %283 = vmatpush1.msra.mxu0 %v236
    %284 = vmatprep.subr.mxu0 0.0
    %285 = vmatpush2.msra.mxu0 0.0
    %286 = vmatprep.subr.mxu0 0.0
    %287 = vmatpush2.msra.mxu0 0.0
    %288 = vmatprep.subr.mxu0 0.0
    %289 = vmatpush2.msra.mxu0 0.0
    %290 = vmatprep.subr.mxu0 0.0
    %291 = vmatpush2.msra.mxu0 0.0
    %292 = vmatprep.subr.mxu0 0.0
    %293 = vmatpush2.msra.mxu0 0.0
    %294 = vmatprep.subr.mxu0 0.0
    %295 = vmatpush2.msra.mxu0 0.0
    %296 = vmatprep.subr.mxu0 0.0
    %297 = vmatpush2.msra.mxu0 0.0
    %298 = vmatprep.subr.mxu0 0.0
    %299 = vmatpush2.msra.mxu0 0.0
    %300 = vmatprep.subr.mxu0 0.0
    %301 = vmatpush2.msra.mxu0 0.0
    %302 = vmatprep.subr.mxu0 0.0
    %303 = vmatpush2.msra.mxu0 0.0
    %304 = vmatprep.subr.mxu0 0.0
    %305 = vmatpush2.msra.mxu0 0.0
    %306 = vmatprep.subr.mxu0 0.0
    %307 = vmatpush2.msra.mxu0 0.0
    %308 = vmatprep.subr.mxu0 0.0
    %309 = vmatpush2.msra.mxu0 0.0
    %310 = vmatprep.subr.mxu0 0.0
    %311 = vmatpush2.msra.mxu0 0.0
    %312 = vmatprep.subr.mxu0 0.0
    %313 = vmatpush2.msra.mxu0 0.0
    %314 = vmatprep.subr.mxu0 0.0
    %315 = vmatpush2.msra.mxu0 0.0
    %316 = vmatprep.mubr.f32.mxu0 0.0
    %317 = vmatmul.mubr.f32.gmra.mxu0 %v235
    %v318 = vpop.f32.mrf.mxu0
    %v319 = vadd.f32 0.0, %v318
    %v320 = vpop.f32.mrf.mxu0
    %321 = vdwg.mxu0
    %v322 = vmul.f32 %v235, %v235
    %323 = vmatprep.subr.mxu0 0.0
    %324 = vmatpush1.msra.mxu0 %v251
    %325 = vmatprep.subr.mxu0 0.0
    %326 = vmatpush1.msra.mxu0 %v250
    %327 = vmatprep.subr.mxu0 0.0
    %328 = vmatpush1.msra.mxu0 %v249
    %329 = vmatprep.subr.mxu0 0.0
    %330 = vmatpush1.msra.mxu0 %v248
    %331 = vmatprep.subr.mxu0 0.0
    %332 = vmatpush1.msra.mxu0 %v247
    %333 = vmatprep.subr.mxu0 0.0
    %334 = vmatpush1.msra.mxu0 %v246
    %335 = vmatprep.subr.mxu0 0.0
    %336 = vmatpush1.msra.mxu0 %v245
    %337 = vmatprep.subr.mxu0 0.0
    %338 = vmatpush1.msra.mxu0 %v244
    %339 = vmatprep.subr.mxu0 0.0
    %340 = vmatpush1.msra.mxu0 %v243
    %341 = vmatprep.subr.mxu0 0.0
    %342 = vmatpush1.msra.mxu0 %v242
    %343 = vmatprep.subr.mxu0 0.0
    %344 = vmatpush1.msra.mxu0 %v241
    %345 = vmatprep.subr.mxu0 0.0
    %346 = vmatpush1.msra.mxu0 %v240
    %347 = vmatprep.subr.mxu0 0.0
    %348 = vmatpush1.msra.mxu0 %v239
    %349 = vmatprep.subr.mxu0 0.0
    %350 = vmatpush1.msra.mxu0 %v238
    %351 = vmatprep.subr.mxu0 0.0
    %352 = vmatpush1.msra.mxu0 %v237
    %353 = vmatprep.subr.mxu0 0.0
    %354 = vmatpush1.msra.mxu0 %v236
    %355 = vmatprep.subr.mxu0 0.0
    %356 = vmatpush2.msra.mxu0 0.0
    %357 = vmatprep.subr.mxu0 0.0
    %358 = vmatpush2.msra.mxu0 0.0
    %359 = vmatprep.subr.mxu0 0.0
    %360 = vmatpush2.msra.mxu0 0.0
    %361 = vmatprep.subr.mxu0 0.0
    %362 = vmatpush2.msra.mxu0 0.0
    %363 = vmatprep.subr.mxu0 0.0
    %364 = vmatpush2.msra.mxu0 0.0
    %365 = vmatprep.subr.mxu0 0.0
    %366 = vmatpush2.msra.mxu0 0.0
    %367 = vmatprep.subr.mxu0 0.0
    %368 = vmatpush2.msra.mxu0 0.0
    %369 = vmatprep.subr.mxu0 0.0
    %370 = vmatpush2.msra.mxu0 0.0
    %371 = vmatprep.subr.mxu0 0.0
    %372 = vmatpush2.msra.mxu0 0.0
    %373 = vmatprep.subr.mxu0 0.0
    %374 = vmatpush2.msra.mxu0 0.0
    %375 = vmatprep.subr.mxu0 0.0
    %376 = vmatpush2.msra.mxu0 0.0
    %377 = vmatprep.subr.mxu0 0.0
    %378 = vmatpush2.msra.mxu0 0.0
    %379 = vmatprep.subr.mxu0 0.0
    %380 = vmatpush2.msra.mxu0 0.0
    %381 = vmatprep.subr.mxu0 0.0
    %382 = vmatpush2.msra.mxu0 0.0
    %383 = vmatprep.subr.mxu0 0.0
    %384 = vmatpush2.msra.mxu0 0.0
    %385 = vmatprep.subr.mxu0 0.0
    %386 = vmatpush2.msra.mxu0 0.0
    %387 = vmatprep.mubr.f32.mxu0 0.0
    %388 = vmatmul.mubr.f32.gmra.mxu0 %v322
    %v389 = vpop.f32.mrf.mxu0
    %v390 = vadd.f32 0.0, %v389
    %v391 = vpop.f32.mrf.mxu0
    %392 = vdwg.mxu0
    %v393 = vmul.f32 %v319, %v319
    %v394 = vsub.f32 %v390, %v393
    %v395 = vmax.f32 %v394, 0.0
    %v396 = vsub.f32 %v235, %v319
    %v397 = vadd.f32 %v395, 1e-05
    %v398 = vrsqrt.pop %v397
    %v399 = vmul.f32 %v396, %v398
    %v400 = vlaneseq
    %v401 = vshrl.u32 %v400, 7
    %v402 = vsub.s32 2, %v401
    %v403 = vrot.slane %v53, %v402
    %v404 = vmul.f32 %v399, %v403
    %v405 = vlaneseq
    %v406 = vshrl.u32 %v405, 7
    %v407 = vsub.s32 3, %v406
    %v408 = vrot.slane %v53, %v407
    %v409 = vadd.f32 %v404, %v408
    %410 = vst [vmem:[#allocation8] sm:$0xff] %v409
    // Predicated region
    $region26: #{tpu_custom_call.1} parent=1 // pred_check
      _
    $region27: #{tpu_custom_call.1} parent=1 // pred_check_branch
      %412 = sbr.rel (0) target = $region29
    $region28: #{tpu_custom_call.1} parent=1 // pred_region
      %s414 = ssub.s32 128, 128
      %415 = vsyncadd [#allocation4], %s414
      %s417 = sshll.u32 [#allocation8], 4
      %s418 = int_to_ptr.vmem [resolvable:$true] %s417
      %420 = dma.vmem_to_hbm [thread:$0]  %s418, 128, %s3, [#allocation4]
    $region29: #{tpu_custom_call.1} parent=1 // pred_fallthru
      _
    // Predicated region
    $region30: #{tpu_custom_call.1} parent=1 // pred_check
      _
    $region31: #{tpu_custom_call.1} parent=1 // pred_check_branch
      %422 = sbr.rel (0) target = $region33
    $region32: #{tpu_custom_call.1} parent=1 // pred_region
      %423 = dma.done [#allocation4], 128
    $region33: #{tpu_custom_call.1} parent=1 // pred_fallthru
      _
    %424 = vsyncpa [#allocation3], 1
    %425 = vsyncpa [#allocation6], 1
    %426 = vsyncpa [#allocation4], 1

</llo_original>
